<compile_context>
chip_gen: v5e
topology: v5e:2x2
jax: 0.10.0
libtpu: 0.0.40
codegen_flags: <defaults>
</compile_context>

<pallas_src>
import numpy as np
import jax
import jax.numpy as jnp
from jax import lax
from jax.experimental import pallas as pl
from jax.experimental.pallas import tpu as pltpu

_EPS = 1e-12
_EPS2 = _EPS * _EPS          # rsqrt(max(|v|^2, eps^2)) == 1 / max(|v|, eps)

_LANE_CHUNK = 256            # lanes processed per unrolled in-kernel chunk
_TILE_MAX = 2048             # max token tile (multiple of _LANE_CHUNK)
_X_TILE_BUDGET = 8 << 20     # VMEM budget for the double-buffered x tile


# ----------------------------------------------------------------------------
# Kernels.  Each grid step handles a (TILE, F) slab of tokens; inside, the
# lane axis is processed in statically-unrolled chunks of _LANE_CHUNK tokens:
#   yT_chunk = W . x_chunk^T  -> (out_dim, chunk), tokens on the lane axis.
# Output block is (12, TILE): rows 0..8 = R row-major, rows 9..11 = t.
# ----------------------------------------------------------------------------
def _rt_quaternion_kernel(x_ref, w_ref, b_ref, o_ref):
    tile = x_ref.shape[0]
    chunk = min(_LANE_CHUNK, tile)
    for c in range(tile // chunk):          # static unroll; temps die per chunk
        s = c * chunk
        ls = slice(s, s + chunk)
        yT = lax.dot_general(
            w_ref[...], x_ref[ls, :],
            dimension_numbers=(((1,), (1,)), ((), ())),
            preferred_element_type=jnp.float32,
        ) + b_ref[...]                      # (6, chunk), bias broadcast on lanes

        qb = yT[0:1, :]
        qc = yT[1:2, :]
        qd = yT[2:3, :]

        # quaternion = (1, qb, qc, qd), normalized (norm >= 1, eps irrelevant).
        inv = lax.rsqrt(1.0 + qb * qb + qc * qc + qd * qd)   # EUP rsqrt
        qw = inv
        qx = qb * inv
        qy = qc * inv
        qz = qd * inv

        xx = qx * qx; yy = qy * qy; zz = qz * qz
        xy = qx * qy; xz = qx * qz; yz = qy * qz
        wx = qw * qx; wy = qw * qy; wz = qw * qz

        # R rows (row-major), lane-dense stores.
        o_ref[0:1, ls] = 1.0 - 2.0 * (yy + zz)
        o_ref[1:2, ls] = 2.0 * (xy - wz)
        o_ref[2:3, ls] = 2.0 * (xz + wy)
        o_ref[3:4, ls] = 2.0 * (xy + wz)
        o_ref[4:5, ls] = 1.0 - 2.0 * (xx + zz)
        o_ref[5:6, ls] = 2.0 * (yz - wx)
        o_ref[6:7, ls] = 2.0 * (xz - wy)
        o_ref[7:8, ls] = 2.0 * (yz + wx)
        o_ref[8:9, ls] = 1.0 - 2.0 * (xx + yy)
        # translation
        o_ref[9:10, ls]  = yT[3:4, :]
        o_ref[10:11, ls] = yT[4:5, :]
        o_ref[11:12, ls] = yT[5:6, :]


def _rt_6d_kernel(x_ref, w_ref, b_ref, o_ref):
    tile = x_ref.shape[0]
    chunk = min(_LANE_CHUNK, tile)
    for c in range(tile // chunk):          # static unroll; temps die per chunk
        s = c * chunk
        ls = slice(s, s + chunk)
        yT = lax.dot_general(
            w_ref[...], x_ref[ls, :],
            dimension_numbers=(((1,), (1,)), ((), ())),
            preferred_element_type=jnp.float32,
        ) + b_ref[...]                      # (9, chunk)

        a1x = yT[0:1, :]; a1y = yT[1:2, :]; a1z = yT[2:3, :]
        a2x = yT[3:4, :]; a2y = yT[4:5, :]; a2z = yT[5:6, :]

        # b1 = normalize(a1)   (F.normalize semantics: x / max(|x|, eps))
        inv1 = lax.rsqrt(jnp.maximum(a1x * a1x + a1y * a1y + a1z * a1z, _EPS2))
        b1x = a1x * inv1; b1y = a1y * inv1; b1z = a1z * inv1

        # Gram-Schmidt: u2 = a2 - <b1,a2> b1 ; b2 = normalize(u2)
        proj = b1x * a2x + b1y * a2y + b1z * a2z
        u2x = a2x - proj * b1x; u2y = a2y - proj * b1y; u2z = a2z - proj * b1z
        inv2 = lax.rsqrt(jnp.maximum(u2x * u2x + u2y * u2y + u2z * u2z, _EPS2))
        b2x = u2x * inv2; b2y = u2y * inv2; b2z = u2z * inv2

        # b3 = b1 x b2
        b3x = b1y * b2z - b1z * b2y
        b3y = b1z * b2x - b1x * b2z
        b3z = b1x * b2y - b1y * b2x

        # R = stack([b1, b2, b3], dim=-1): b1/b2/b3 are COLUMNS.  Row-major rows:
        o_ref[0:1, ls] = b1x; o_ref[1:2, ls] = b2x; o_ref[2:3, ls] = b3x
        o_ref[3:4, ls] = b1y; o_ref[4:5, ls] = b2y; o_ref[5:6, ls] = b3y
        o_ref[6:7, ls] = b1z; o_ref[7:8, ls] = b2z; o_ref[8:9, ls] = b3z
        # translation
        o_ref[9:10, ls]  = yT[6:7, :]
        o_ref[10:11, ls] = yT[7:8, :]
        o_ref[11:12, ls] = yT[8:9, :]


# ----------------------------------------------------------------------------
# Wrapper
# ----------------------------------------------------------------------------
def _select_tile(n, feat_dim, itemsize):
    if n <= _LANE_CHUNK:
        return n                        # one small full-extent block
    # Budget-aware tile: keep the double-buffered x tile within _X_TILE_BUDGET
    # (safe on v5e's 16 MiB scoped default and v7x's 64 MiB/TC physical VMEM).
    tile = _X_TILE_BUDGET // (2 * feat_dim * itemsize)
    tile = (tile // _LANE_CHUNK) * _LANE_CHUNK
    tile = max(_LANE_CHUNK, min(tile, _TILE_MAX))
    # Don't over-allocate output far past n.
    n_round = ((n + _LANE_CHUNK - 1) // _LANE_CHUNK) * _LANE_CHUNK
    return min(tile, n_round)


def rotation_translation_prediction(x, weight, bias, rot_repr="quaternion",
                                    tile_override=None):
    assert rot_repr in ("quaternion", "6d")
    out_dim = 6 if rot_repr == "quaternion" else 9
    feat_dim = x.shape[-1]
    assert tuple(weight.shape) == (out_dim, feat_dim)

    lead = x.shape[:-1]
    n = int(np.prod(lead)) if lead else 1
    assert n >= 1
    x2 = x.reshape(n, feat_dim)      # merging leading dims only — no HBM copy
    itemsize = jnp.dtype(x2.dtype).itemsize

    tile = int(tile_override) if tile_override is not None else \
        _select_tile(n, feat_dim, itemsize)
    if tile < n:
        # Output block (12, tile) must be lane-dense and chunk-divisible.
        assert tile % 128 == 0, "tile must be a multiple of 128 when n > tile"
        assert tile <= _LANE_CHUNK or tile % _LANE_CHUNK == 0

    n_blocks = (n + tile - 1) // tile
    n_out = n_blocks * tile          # over-allocate output only (never pad x)

    # Feed the MXU in the activation dtype (bf16 stays bf16); accumulate f32.
    w = jnp.asarray(weight).astype(x2.dtype)                       # (out_dim, F)
    b = jnp.asarray(bias).astype(jnp.float32).reshape(out_dim, 1)  # (out_dim, 1)

    kernel = _rt_quaternion_kernel if rot_repr == "quaternion" else _rt_6d_kernel

    # Explicit VMEM budget so the big tile keeps double-buffering alive on all
    # generations (default scoped VMEM is 16 MiB v5e / 32 MiB v6e, v7x).
    vmem_needed = (2 * tile * feat_dim * itemsize        # x double-buffer
                   + 2 * 12 * tile * 4                   # output double-buffer
                   + 2 * out_dim * feat_dim * itemsize   # weight
                   + 2 * out_dim * 4)                    # bias
    vmem_limit = int(min(max(2 * vmem_needed, 32 << 20), 48 << 20))

    cost = pl.CostEstimate(
        flops=2 * out_dim * feat_dim * n_out,
        transcendentals=(1 if rot_repr == "quaternion" else 2) * n_out,
        bytes_accessed=(n * feat_dim * itemsize + 12 * n_out * 4
                        + out_dim * feat_dim * itemsize + out_dim * 4),
    )

    # Fused, lane-dense output: rows 0..8 = R (row-major), rows 9..11 = t.
    # NOTE: the ragged last x block reads unspecified data past row n (Pallas
    # edge-block semantics); its results land only in output columns >= n,
    # which are sliced off below — kept tokens are lane-independent.
    out_t = pl.pallas_call(
        kernel,
        out_shape=jax.ShapeDtypeStruct((12, n_out), jnp.float32),
        grid_spec=pltpu.PrefetchScalarGridSpec(
            num_scalar_prefetch=0,
            grid=(n_blocks,),
            in_specs=[
                pl.BlockSpec((tile, feat_dim), lambda i: (i, 0)),
                pl.BlockSpec((out_dim, feat_dim), lambda i: (0, 0)),
                pl.BlockSpec((out_dim, 1), lambda i: (0, 0)),
            ],
            out_specs=pl.BlockSpec((12, tile), lambda i: (0, i)),
        ),
        compiler_params=pltpu.CompilerParams(
            dimension_semantics=("parallel",),   # shards steps across v7x TCs
            vmem_limit_bytes=vmem_limit,
        ),
        cost_estimate=cost,
    )(x2, w, b)

    # Single transpose pass; split R / t from the (n, 12) result.
    packed = out_t[:, :n].T
    R = packed[:, :9].reshape(*lead, 3, 3)
    t = packed[:, 9:12].reshape(*lead, 3)
    return R, t


# ----------------------------------------------------------------------------
# Pure-JAX reference (mirrors the PyTorch module) for a correctness check.
# ----------------------------------------------------------------------------
def _ref_forward(x, weight, bias, rot_repr):
    y = x @ weight.T + bias
    if rot_repr == "quaternion":
        q = jnp.concatenate([jnp.ones_like(y[..., :1]), y[..., 0:3]], axis=-1)
        q = q / jnp.maximum(jnp.linalg.norm(q, axis=-1, keepdims=True), _EPS)
        qw, qx, qy, qz = q[..., 0], q[..., 1], q[..., 2], q[..., 3]
        R = jnp.stack([
            1 - 2 * (qy**2 + qz**2), 2 * (qx*qy - qz*qw), 2 * (qx*qz + qy*qw),
            2 * (qx*qy + qz*qw), 1 - 2 * (qx**2 + qz**2), 2 * (qy*qz - qx*qw),
            2 * (qx*qz - qy*qw), 2 * (qy*qz + qx*qw), 1 - 2 * (qx**2 + qy**2),
        ], axis=-1).reshape(*y.shape[:-1], 3, 3)
        return R, y[..., 3:6]
    else:
        a1, a2 = y[..., 0:3], y[..., 3:6]
        b1 = a1 / jnp.maximum(jnp.linalg.norm(a1, axis=-1, keepdims=True), _EPS)
        u2 = a2 - jnp.sum(b1 * a2, axis=-1, keepdims=True) * b1
        b2 = u2 / jnp.maximum(jnp.linalg.norm(u2, axis=-1, keepdims=True), _EPS)
        b3 = jnp.cross(b1, b2)
        R = jnp.stack([b1, b2, b3], axis=-1)
        return R, y[..., 6:9]


def _check_case(x, feat_dim, rot_repr, kw, kb, tile_override=None):
    out_dim = 6 if rot_repr == "quaternion" else 9
    bound = 1.0 / np.sqrt(feat_dim)
    weight = jax.random.uniform(kw, (out_dim, feat_dim), jnp.float32, -bound, bound)
    bias = jax.random.uniform(kb, (out_dim,), jnp.float32, -bound, bound)

    R, t = rotation_translation_prediction(x, weight, bias, rot_repr,
                                           tile_override=tile_override)
    R, t = jax.block_until_ready(R), jax.block_until_ready(t)
    assert R.shape == (*x.shape[:-1], 3, 3) and t.shape == (*x.shape[:-1], 3)

    R_ref, t_ref = _ref_forward(x, weight, bias, rot_repr)
    ok = bool(jnp.allclose(R, R_ref, atol=1e-4, rtol=1e-4))
    ok &= bool(jnp.allclose(t, t_ref, atol=1e-4, rtol=1e-4))
    return ok


if __name__ == "__main__":
    key = jax.random.PRNGKey(0)
    kx, kw, kb = jax.random.split(key, 3)
    ok = True

    # Case A: small primary case — single full-extent tile (n = 16 tokens).
    batch, seq, feat_dim = 2, 8, 32
    xa = jax.random.normal(kx, (batch, seq, feat_dim), dtype=jnp.float32)
    for rot_repr in ("quaternion", "6d"):
        ok &= _check_case(xa, feat_dim, rot_repr, kw, kb)

    # Case B: multi-tile + ragged last tile + multi-chunk inner loop
    # (n = 600 tokens, tile = 512 -> grid = 2, 2 chunks of 256 per tile).
    b2_, s2_, f2_ = 3, 200, 64
    xb = jax.random.normal(kx, (b2_, s2_, f2_), dtype=jnp.float32)
    for rot_repr in ("quaternion", "6d"):
        ok &= _check_case(xb, f2_, rot_repr, kw, kb, tile_override=512)

    # Case C: default adaptive tile with n > 256 (single ragged 768-wide tile,
    # 3 chunks) — exercises the budget-aware tile selection path.
    ok &= _check_case(xb, f2_, "quaternion", kw, kb)

    print("KERNEL_OK" if ok else "MISMATCH")
</pallas_src>

<mosaic_0001>
module attributes {stable_mosaic.version = 11 : i64} {
  func.func @_rt_quaternion_kernel(%arg0: i32, %arg1: memref<16x32xf32, #tpu.memory_space<vmem>>, %arg2: memref<6x32xf32, #tpu.memory_space<vmem>>, %arg3: memref<6x1xf32, #tpu.memory_space<vmem>>, %arg4: memref<12x16xf32, #tpu.memory_space<vmem>>) attributes {dimension_semantics = [#tpu.dimension_semantics<parallel>], iteration_bounds = array<i64: 1>, scalar_prefetch = 0 : i64, scratch_operands = 0 : i64, tpu.core_type = #tpu.core_type<tc>, window_params = [{transform_indices = @transform_0, window_bounds = array<i64: 16, 32>}, {pipeline_mode = #tpu.pipeline_mode<synchronous>, transform_indices = @transform_1, window_bounds = array<i64: 6, 32>}, {pipeline_mode = #tpu.pipeline_mode<synchronous>, transform_indices = @transform_2, window_bounds = array<i64: 6, 1>}, {transform_indices = @transform_3, window_bounds = array<i64: 12, 16>}]} {
    %c0 = arith.constant 0 : index
    %c0_0 = arith.constant 0 : index
    %0 = vector.load %arg2[%c0, %c0_0] : memref<6x32xf32, #tpu.memory_space<vmem>>, vector<6x32xf32>
    %c0_1 = arith.constant 0 : index
    %c0_2 = arith.constant 0 : index
    %1 = vector.load %arg1[%c0_1, %c0_2] : memref<16x32xf32, #tpu.memory_space<vmem>>, vector<16x32xf32>
    %cst = arith.constant dense<0.000000e+00> : vector<6x16xf32>
    %2 = tpu.matmul %0, %1, %cst {dimension_numbers = #tpu.dot_dimension_numbers<[1], [1], [0], [0], [0, 0, 1, 0], [], []>} : vector<6x32xf32>, vector<16x32xf32>, vector<6x16xf32> -> vector<6x16xf32>
    %c0_3 = arith.constant 0 : index
    %c0_4 = arith.constant 0 : index
    %3 = vector.load %arg3[%c0_3, %c0_4] : memref<6x1xf32, #tpu.memory_space<vmem>>, vector<6x1xf32>
    %4 = vector.broadcast %3 : vector<6x1xf32> to vector<6x16xf32>
    %5 = arith.addf %2, %4 : vector<6x16xf32>
    %6 = vector.extract_strided_slice %5 {offsets = [0, 0], sizes = [1, 16], strides = [1, 1]} : vector<6x16xf32> to vector<1x16xf32>
    %7 = vector.extract_strided_slice %5 {offsets = [1, 0], sizes = [1, 16], strides = [1, 1]} : vector<6x16xf32> to vector<1x16xf32>
    %8 = vector.extract_strided_slice %5 {offsets = [2, 0], sizes = [1, 16], strides = [1, 1]} : vector<6x16xf32> to vector<1x16xf32>
    %9 = arith.mulf %6, %6 : vector<1x16xf32>
    %cst_5 = arith.constant 1.000000e+00 : f32
    %10 = vector.broadcast %cst_5 : f32 to vector<1x16xf32>
    %11 = arith.addf %10, %9 : vector<1x16xf32>
    %12 = arith.mulf %7, %7 : vector<1x16xf32>
    %13 = arith.addf %11, %12 : vector<1x16xf32>
    %14 = arith.mulf %8, %8 : vector<1x16xf32>
    %15 = arith.addf %13, %14 : vector<1x16xf32>
    %16 = math.rsqrt %15 : vector<1x16xf32>
    %17 = arith.mulf %6, %16 : vector<1x16xf32>
    %18 = arith.mulf %7, %16 : vector<1x16xf32>
    %19 = arith.mulf %8, %16 : vector<1x16xf32>
    %20 = arith.mulf %17, %17 : vector<1x16xf32>
    %21 = arith.mulf %18, %18 : vector<1x16xf32>
    %22 = arith.mulf %19, %19 : vector<1x16xf32>
    %23 = arith.mulf %17, %18 : vector<1x16xf32>
    %24 = arith.mulf %17, %19 : vector<1x16xf32>
    %25 = arith.mulf %18, %19 : vector<1x16xf32>
    %26 = arith.mulf %16, %17 : vector<1x16xf32>
    %27 = arith.mulf %16, %18 : vector<1x16xf32>
    %28 = arith.mulf %16, %19 : vector<1x16xf32>
    %29 = arith.addf %21, %22 : vector<1x16xf32>
    %cst_6 = arith.constant 2.000000e+00 : f32
    %30 = vector.broadcast %cst_6 : f32 to vector<1x16xf32>
    %31 = arith.mulf %30, %29 : vector<1x16xf32>
    %cst_7 = arith.constant 1.000000e+00 : f32
    %32 = vector.broadcast %cst_7 : f32 to vector<1x16xf32>
    %33 = arith.subf %32, %31 : vector<1x16xf32>
    %c0_8 = arith.constant 0 : index
    %c0_9 = arith.constant 0 : index
    %34 = vector.load %arg4[%c0_8, %c0_9] : memref<12x16xf32, #tpu.memory_space<vmem>>, vector<1x16xf32>
    tpu.vector_store %arg4[%c0_8, %c0_9], %33 {strides = array<i32>} : memref<12x16xf32, #tpu.memory_space<vmem>>, vector<1x16xf32>,
    %35 = arith.subf %23, %28 : vector<1x16xf32>
    %cst_10 = arith.constant 2.000000e+00 : f32
    %36 = vector.broadcast %cst_10 : f32 to vector<1x16xf32>
    %37 = arith.mulf %36, %35 : vector<1x16xf32>
    %c1 = arith.constant 1 : index
    %c0_11 = arith.constant 0 : index
    %38 = vector.load %arg4[%c1, %c0_11] : memref<12x16xf32, #tpu.memory_space<vmem>>, vector<1x16xf32>
    tpu.vector_store %arg4[%c1, %c0_11], %37 {strides = array<i32>} : memref<12x16xf32, #tpu.memory_space<vmem>>, vector<1x16xf32>,
    %39 = arith.addf %24, %27 : vector<1x16xf32>
    %cst_12 = arith.constant 2.000000e+00 : f32
    %40 = vector.broadcast %cst_12 : f32 to vector<1x16xf32>
    %41 = arith.mulf %40, %39 : vector<1x16xf32>
    %c2 = arith.constant 2 : index
    %c0_13 = arith.constant 0 : index
    %42 = vector.load %arg4[%c2, %c0_13] : memref<12x16xf32, #tpu.memory_space<vmem>>, vector<1x16xf32>
    tpu.vector_store %arg4[%c2, %c0_13], %41 {strides = array<i32>} : memref<12x16xf32, #tpu.memory_space<vmem>>, vector<1x16xf32>,
    %43 = arith.addf %23, %28 : vector<1x16xf32>
    %cst_14 = arith.constant 2.000000e+00 : f32
    %44 = vector.broadcast %cst_14 : f32 to vector<1x16xf32>
    %45 = arith.mulf %44, %43 : vector<1x16xf32>
    %c3 = arith.constant 3 : index
    %c0_15 = arith.constant 0 : index
    %46 = vector.load %arg4[%c3, %c0_15] : memref<12x16xf32, #tpu.memory_space<vmem>>, vector<1x16xf32>
    tpu.vector_store %arg4[%c3, %c0_15], %45 {strides = array<i32>} : memref<12x16xf32, #tpu.memory_space<vmem>>, vector<1x16xf32>,
    %47 = arith.addf %20, %22 : vector<1x16xf32>
    %cst_16 = arith.constant 2.000000e+00 : f32
    %48 = vector.broadcast %cst_16 : f32 to vector<1x16xf32>
    %49 = arith.mulf %48, %47 : vector<1x16xf32>
    %cst_17 = arith.constant 1.000000e+00 : f32
    %50 = vector.broadcast %cst_17 : f32 to vector<1x16xf32>
    %51 = arith.subf %50, %49 : vector<1x16xf32>
    %c4 = arith.constant 4 : index
    %c0_18 = arith.constant 0 : index
    %52 = vector.load %arg4[%c4, %c0_18] : memref<12x16xf32, #tpu.memory_space<vmem>>, vector<1x16xf32>
    tpu.vector_store %arg4[%c4, %c0_18], %51 {strides = array<i32>} : memref<12x16xf32, #tpu.memory_space<vmem>>, vector<1x16xf32>,
    %53 = arith.subf %25, %26 : vector<1x16xf32>
    %cst_19 = arith.constant 2.000000e+00 : f32
    %54 = vector.broadcast %cst_19 : f32 to vector<1x16xf32>
    %55 = arith.mulf %54, %53 : vector<1x16xf32>
    %c5 = arith.constant 5 : index
    %c0_20 = arith.constant 0 : index
    %56 = vector.load %arg4[%c5, %c0_20] : memref<12x16xf32, #tpu.memory_space<vmem>>, vector<1x16xf32>
    tpu.vector_store %arg4[%c5, %c0_20], %55 {strides = array<i32>} : memref<12x16xf32, #tpu.memory_space<vmem>>, vector<1x16xf32>,
    %57 = arith.subf %24, %27 : vector<1x16xf32>
    %cst_21 = arith.constant 2.000000e+00 : f32
    %58 = vector.broadcast %cst_21 : f32 to vector<1x16xf32>
    %59 = arith.mulf %58, %57 : vector<1x16xf32>
    %c6 = arith.constant 6 : index
    %c0_22 = arith.constant 0 : index
    %60 = vector.load %arg4[%c6, %c0_22] : memref<12x16xf32, #tpu.memory_space<vmem>>, vector<1x16xf32>
    tpu.vector_store %arg4[%c6, %c0_22], %59 {strides = array<i32>} : memref<12x16xf32, #tpu.memory_space<vmem>>, vector<1x16xf32>,
    %61 = arith.addf %25, %26 : vector<1x16xf32>
    %cst_23 = arith.constant 2.000000e+00 : f32
    %62 = vector.broadcast %cst_23 : f32 to vector<1x16xf32>
    %63 = arith.mulf %62, %61 : vector<1x16xf32>
    %c7 = arith.constant 7 : index
    %c0_24 = arith.constant 0 : index
    %64 = vector.load %arg4[%c7, %c0_24] : memref<12x16xf32, #tpu.memory_space<vmem>>, vector<1x16xf32>
    tpu.vector_store %arg4[%c7, %c0_24], %63 {strides = array<i32>} : memref<12x16xf32, #tpu.memory_space<vmem>>, vector<1x16xf32>,
    %65 = arith.addf %20, %21 : vector<1x16xf32>
    %cst_25 = arith.constant 2.000000e+00 : f32
    %66 = vector.broadcast %cst_25 : f32 to vector<1x16xf32>
    %67 = arith.mulf %66, %65 : vector<1x16xf32>
    %cst_26 = arith.constant 1.000000e+00 : f32
    %68 = vector.broadcast %cst_26 : f32 to vector<1x16xf32>
    %69 = arith.subf %68, %67 : vector<1x16xf32>
    %c8 = arith.constant 8 : index
    %c0_27 = arith.constant 0 : index
    %70 = vector.load %arg4[%c8, %c0_27] : memref<12x16xf32, #tpu.memory_space<vmem>>, vector<1x16xf32>
    tpu.vector_store %arg4[%c8, %c0_27], %69 {strides = array<i32>} : memref<12x16xf32, #tpu.memory_space<vmem>>, vector<1x16xf32>,
    %71 = vector.extract_strided_slice %5 {offsets = [3, 0], sizes = [1, 16], strides = [1, 1]} : vector<6x16xf32> to vector<1x16xf32>
    %c9 = arith.constant 9 : index
    %c0_28 = arith.constant 0 : index
    %72 = vector.load %arg4[%c9, %c0_28] : memref<12x16xf32, #tpu.memory_space<vmem>>, vector<1x16xf32>
    tpu.vector_store %arg4[%c9, %c0_28], %71 {strides = array<i32>} : memref<12x16xf32, #tpu.memory_space<vmem>>, vector<1x16xf32>,
    %73 = vector.extract_strided_slice %5 {offsets = [4, 0], sizes = [1, 16], strides = [1, 1]} : vector<6x16xf32> to vector<1x16xf32>
    %c10 = arith.constant 10 : index
    %c0_29 = arith.constant 0 : index
    %74 = vector.load %arg4[%c10, %c0_29] : memref<12x16xf32, #tpu.memory_space<vmem>>, vector<1x16xf32>
    tpu.vector_store %arg4[%c10, %c0_29], %73 {strides = array<i32>} : memref<12x16xf32, #tpu.memory_space<vmem>>, vector<1x16xf32>,
    %75 = vector.extract_strided_slice %5 {offsets = [5, 0], sizes = [1, 16], strides = [1, 1]} : vector<6x16xf32> to vector<1x16xf32>
    %c11 = arith.constant 11 : index
    %c0_30 = arith.constant 0 : index
    %76 = vector.load %arg4[%c11, %c0_30] : memref<12x16xf32, #tpu.memory_space<vmem>>, vector<1x16xf32>
    tpu.vector_store %arg4[%c11, %c0_30], %75 {strides = array<i32>} : memref<12x16xf32, #tpu.memory_space<vmem>>, vector<1x16xf32>,
    return
  }
  func.func @transform_0(%arg0: i32) -> (i32, i32) {
    %c0_i32 = arith.constant 0 : i32
    %c0_i32_0 = arith.constant 0 : i32
    return %arg0, %c0_i32 : i32, i32
  }
  func.func @transform_1(%arg0: i32) -> (i32, i32) {
    %c0_i32 = arith.constant 0 : i32
    %c0_i32_0 = arith.constant 0 : i32
    %c0_i32_1 = arith.constant 0 : i32
    return %c0_i32, %c0_i32_0 : i32, i32
  }
  func.func @transform_2(%arg0: i32) -> (i32, i32) {
    %c0_i32 = arith.constant 0 : i32
    %c0_i32_0 = arith.constant 0 : i32
    %c0_i32_1 = arith.constant 0 : i32
    return %c0_i32, %c0_i32_0 : i32, i32
  }
  func.func @transform_3(%arg0: i32) -> (i32, i32) {
    %c0_i32 = arith.constant 0 : i32
    %c0_i32_0 = arith.constant 0 : i32
    return %c0_i32, %arg0 : i32, i32
  }
}

</mosaic_0001>

<llo_original>
// kernel: tpu_custom_call.1
$region0: #{tpu_custom_call.1}
  #allocation0 [shape = 'u32[]', space=smem, size = 0x4, offset = 0x4, fixed_abs, tag = 'smem constant byte address 0x4 - core index']
  #allocation1 [shape = 'u32[72,128]{1,0:T(1,128)}', space=vmem, size = 0x9000, scoped, tag = 'internal scratch']
  %s0 = inlined_call_operand.hbm [shape: f32[16,32], index: 0, kind: input, shape index: {}]
  %s1 = inlined_call_operand.vmem [shape: f32[6,32], index: 1, kind: input, shape index: {}]
  %s2 = inlined_call_operand.vmem [shape: f32[6,1], index: 2, kind: input, shape index: {}]
  %s3 = inlined_call_operand.hbm [shape: f32[12,16], index: 3, kind: output, shape index: {}]
  %s4 = sld [smem:[#allocation0]]
  $region26: #{tpu_custom_call.1} parent=0
    _
  %s6 = ssub.s32 1, %s4
  %s7 = scalar_select 0, %s6, %s4
  $region1: #{tpu_custom_call.1} parent=0
    #allocation2 [shape = 'u8[8192]{0}', space=vmem, size = 0x2000, scoped, tag = 'input window, operand 0, single buffered']
    #allocation3 [shape = 's32[1]{0}', space=sflag, size = 0x4, scoped, tag = 'scoped memory for tpu_custom_call.1']
    #allocation4 [shape = 's32[1]{0}', space=sflag, size = 0x4, scoped, tag = 'scoped memory for tpu_custom_call.1']
    #allocation5 [shape = 'u8[8192]{0}', space=vmem, size = 0x2000, scoped, tag = 'output window, operand 0, single buffered']
    %8 = vsyncpa [#allocation3], 0
    %9 = vsyncpa [#allocation4], 0
    // Predicated region
    $region2: #{tpu_custom_call.1} parent=1 // pred_check
      _
    $region3: #{tpu_custom_call.1} parent=1 // pred_check_branch
      %11 = sbr.rel (0) target = $region5
    $region4: #{tpu_custom_call.1} parent=1 // pred_region
      %13 = vsyncadd [#allocation3], 0
      %s14 = sshll.u32 %s0, 4
      %s15 = int_to_ptr.hbm [resolvable:$true] %s14
      %s16 = sshll.u32 [#allocation2], 4
      %s17 = int_to_ptr.vmem [resolvable:$true] %s16
      %22 = dma.hbm_to_vmem [thread:$0]  %s15, 256, %s17, [#allocation3], 128, 128, 8
    $region5: #{tpu_custom_call.1} parent=1 // pred_fallthru
      _
    // Predicated region
    $region6: #{tpu_custom_call.1} parent=1 // pred_check
      _
    $region7: #{tpu_custom_call.1} parent=1 // pred_check_branch
      %24 = sbr.rel (0) target = $region9
    $region8: #{tpu_custom_call.1} parent=1 // pred_region
      _
    $region9: #{tpu_custom_call.1} parent=1 // pred_fallthru
      _
    // Predicated region
    $region10: #{tpu_custom_call.1} parent=1 // pred_check
      _
    $region11: #{tpu_custom_call.1} parent=1 // pred_check_branch
      %26 = sbr.rel (0) target = $region13
    $region12: #{tpu_custom_call.1} parent=1 // pred_region
      _
    $region13: #{tpu_custom_call.1} parent=1 // pred_fallthru
      _
    // Predicated region
    $region14: #{tpu_custom_call.1} parent=1 // pred_check
      _
    $region15: #{tpu_custom_call.1} parent=1 // pred_check_branch
      %28 = sbr.rel (0) target = $region17
    $region16: #{tpu_custom_call.1} parent=1 // pred_region
      %30 = dma.done [#allocation3], 256
    $region17: #{tpu_custom_call.1} parent=1 // pred_fallthru
      _
    %v31 = vld [vmem:[%s1] sm:$0x3f]
    %v32 = vld [vmem:[#allocation2] sm:$0xff]
    %v33 = vld [vmem:[#allocation2 + $0x8] sm:$0xff]
    %v34 = vld [vmem:[%s2] sm:$0x3f]
    %36 = vset.pattern.permute.xlu0 0
    %37 = vperm.xlu0 %36, %v34
    %v38 = vpop.permute.xlu0 %37
    %vm40 = vcmask 261120
    %v42 = vsel %vm40, %v31, 0
    %v45 = vsel %vm40, %v32, 0
    %v48 = vsel %vm40, %v33, 0
    %50 = vmatpush.xpose.msra.mxu0 0.0
    %51 = vmatpush.xpose.msra.mxu0 0.0
    %52 = vmatpush.xpose.msra.mxu0 0.0
    %53 = vmatpush.xpose.msra.mxu0 0.0
    %54 = vmatpush.xpose.msra.mxu0 0.0
    %55 = vmatpush.xpose.msra.mxu0 0.0
    %56 = vmatpush.xpose.msra.mxu0 0.0
    %57 = vmatpush.xpose.msra.mxu0 0.0
    %58 = vmatpush.xpose.msra.mxu0 0.0
    %59 = vmatpush.xpose.msra.mxu0 0.0
    %60 = vmatpush.xpose.msra.mxu0 0.0
    %61 = vmatpush.xpose.msra.mxu0 0.0
    %62 = vmatpush.xpose.msra.mxu0 0.0
    %63 = vmatpush.xpose.msra.mxu0 0.0
    %64 = vmatpush.xpose.msra.mxu0 %v48
    %65 = vmatpush.xpose.msra.mxu0 %v45
    %66 = vmatmul.f32.gmra.mxu0 %v42
    %v67 = vpop.f32.mrf.mxu0
    %v68 = vadd.f32 %v38, %v67
    %69 = vdwg.mxu0
    %v70 = vmul.f32 %v68, %v68
    %v71 = vadd.f32 %v70, 1.0
    %v73 = vrot.slane %v70, 1
    %v75 = vadd.f32 %v71, %v73
    %v76 = vrot.slane %v70, 2
    %v78 = vadd.f32 %v75, %v76
    %v79 = vrsqrt.pop %v78
    %v80 = vmul.f32 %v79, %v78
    %v81 = vmul.f32 %v80, %v79
    %v82 = vmul.f32 0.5, %v81
    %v83 = vsub.f32 1.5, %v82
    %v84 = vmul.f32 %v79, %v83
    %vm85 = vweird.f32 %v78
    %vm86 = vweird.f32 %v79
    %vm87 = vmor %vm85, %vm86
    %v88 = vsel %vm87, %v79, %v84
    %v89 = vmul.f32 %v68, %v88
    %v91 = vrot.slane %v88, 7
    %v93 = vmul.f32 %v68, %v91
    %v94 = vrot.slane %v88, 6
    %v96 = vmul.f32 %v68, %v94
    %v97 = vmul.f32 %v89, %v89
    %v98 = vmul.f32 %v93, %v93
    %v99 = vmul.f32 %v96, %v96
    %v101 = vrot.slane %v93, 1
    %v103 = vmul.f32 %v89, %v101
    %v105 = vrot.slane %v96, 2
    %v107 = vmul.f32 %v89, %v105
    %v108 = vrot.slane %v96, 1
    %v110 = vmul.f32 %v93, %v108
    %v111 = vmul.f32 %v88, %v89
    %v112 = vmul.f32 %v88, %v101
    %v113 = vmul.f32 %v88, %v105
    %v115 = vrot.slane %v99, 1
    %v117 = vadd.f32 %v98, %v115
    %v118 = vmul.f32 %v117, 2.0
    %v119 = vsub.f32 1.0, %v118
    %vm120 = vcmask 123905
    %121 = vst.msk [vmem:[#allocation5 - $0x1] sm:$0x2] %vm120, %v119
    %v122 = vsub.f32 %v103, %v113
    %v123 = vmul.f32 %v122, 2.0
    %vm124 = vcmask 122880
    %125 = vst.msk [vmem:[#allocation5 + $0x1] sm:$0x1] %vm124, %v123
    %v126 = vadd.f32 %v107, %v112
    %v127 = vmul.f32 %v126, 2.0
    %128 = vst.msk [vmem:[#allocation5 + $0x2] sm:$0x1] %vm124, %v127
    %v129 = vadd.f32 %v103, %v113
    %v130 = vmul.f32 %v129, 2.0
    %131 = vst.msk [vmem:[#allocation5 + $0x3] sm:$0x1] %vm124, %v130
    %v132 = vrot.slane %v99, 2
    %v134 = vadd.f32 %v97, %v132
    %v135 = vmul.f32 %v134, 2.0
    %v136 = vsub.f32 1.0, %v135
    %137 = vst.msk [vmem:[#allocation5 + $0x4] sm:$0x1] %vm124, %v136
    %v139 = vrot.slane %v111, 7
    %v141 = vsub.f32 %v110, %v139
    %v142 = vmul.f32 %v141, 2.0
    %143 = vst.msk [vmem:[#allocation5 + $0x4] sm:$0x2] %vm120, %v142
    %v144 = vsub.f32 %v107, %v112
    %v145 = vmul.f32 %v144, 2.0
    %146 = vst.msk [vmem:[#allocation5 + $0x6] sm:$0x1] %vm124, %v145
    %v147 = vadd.f32 %v110, %v139
    %v148 = vmul.f32 %v147, 2.0
    %149 = vst.msk [vmem:[#allocation5 + $0x6] sm:$0x2] %vm120, %v148
    %v151 = vrot.slane %v98, 1
    %v153 = vadd.f32 %v97, %v151
    %v154 = vmul.f32 %v153, 2.0
    %v155 = vsub.f32 1.0, %v154
    %156 = vst.msk [vmem:[#allocation5 + $0x8] sm:$0x1] %vm124, %v155
    %vm157 = vcmask 125955
    %158 = vst.msk [vmem:[#allocation5 + $0x6] sm:$0x8] %vm157, %v68
    %vm159 = vcmask 126980
    %160 = vst.msk [vmem:[#allocation5 + $0x6] sm:$0x10] %vm159, %v68
    %vm161 = vcmask 128005
    %162 = vst.msk [vmem:[#allocation5 + $0x6] sm:$0x20] %vm161, %v68
    // Predicated region
    $region18: #{tpu_custom_call.1} parent=1 // pred_check
      _
    $region19: #{tpu_custom_call.1} parent=1 // pred_check_branch
      %164 = sbr.rel (0) target = $region21
    $region20: #{tpu_custom_call.1} parent=1 // pred_region
      %166 = vsyncadd [#allocation4], 0
      %s167 = sshll.u32 [#allocation5], 4
      %s168 = int_to_ptr.vmem [resolvable:$true] %s167
      %s169 = sshll.u32 %s3, 4
      %s170 = int_to_ptr.hbm [resolvable:$true] %s169
      %175 = dma.vmem_to_hbm [thread:$0]  %s168, 256, %s170, [#allocation4], 128, 128, 8
    $region21: #{tpu_custom_call.1} parent=1 // pred_fallthru
      _
    // Predicated region
    $region22: #{tpu_custom_call.1} parent=1 // pred_check
      _
    $region23: #{tpu_custom_call.1} parent=1 // pred_check_branch
      %177 = sbr.rel (0) target = $region25
    $region24: #{tpu_custom_call.1} parent=1 // pred_region
      %179 = dma.done [#allocation4], 256
    $region25: #{tpu_custom_call.1} parent=1 // pred_fallthru
      _
    %180 = vsyncpa [#allocation3], 1
    %181 = vsyncpa [#allocation4], 1

</llo_original>
